<compile_context>
chip_gen: v7x
topology: tpu7x:2x2x1
jax: 0.10.0
libtpu: 0.0.40
codegen_flags: <defaults>
</compile_context>

<pallas_src>
import functools

import jax
import jax.numpy as jnp
from jax import lax
from jax.experimental import pallas as pl
from jax.experimental.pallas import tpu as pltpu

_INV_SQRT2 = 0.7071067811865476  # 1/sqrt(2)


def _ffn_kernel(x_ref, w1_ref, b1_ref, w2_ref, b2_ref, o_ref, acc_ref):
    # x_ref:   (tm, H)       current row tile (resident across j)
    # w1_ref:  (H, tn)       slice of W1^T over the intermediate dim
    # b1_ref:  (1, tn)       matching bias slice
    # w2_ref:  (tn, H)       slice of W2^T over the intermediate dim
    # b2_ref:  (1, H)
    # o_ref:   (tm, H)       output tile (resident across j)
    # acc_ref: (tm, H) f32   accumulator scratch
    j = pl.program_id(1)

    @pl.when(j == 0)
    def _():
        acc_ref[...] = jnp.zeros_like(acc_ref)

    # linear_1 slice: native-dtype operands on the MXU, f32 accumulation.
    h = jnp.dot(x_ref[...], w1_ref[...], preferred_element_type=jnp.float32)
    h = h + b1_ref[...].astype(jnp.float32)

    # exact GELU (erf formulation == torch.nn.GELU default)
    h = 0.5 * h * (1.0 + lax.erf(h * _INV_SQRT2))

    # linear_2 partial product, accumulated over the intermediate grid axis.
    acc_ref[...] += jnp.dot(h.astype(x_ref.dtype), w2_ref[...],
                            preferred_element_type=jnp.float32)

    @pl.when(j == pl.num_programs(1) - 1)
    def _():
        out = acc_ref[...] + b2_ref[...].astype(jnp.float32)
        # dropout (eval / inference) = identity
        o_ref[...] = out.astype(o_ref.dtype)


def _round_up(x, m):
    return ((x + m - 1) // m) * m


def _pick_inter_tile(inter):
    # Last dim of the W1 block must be a multiple of 128 or the full dim.
    for tn in (512, 256, 128):
        if inter % tn == 0:
            return tn
    return inter


@functools.partial(jax.jit, static_argnames=("tm",))
def feed_forward(x, w1, b1, w2, b2, tm=256):
    """x: (..., hidden). w1: (intermediate, hidden), b1: (intermediate,),
    w2: (hidden, intermediate), b2: (hidden,)  -- PyTorch nn.Linear layout."""
    orig_shape = x.shape
    hidden = orig_shape[-1]
    inter = w1.shape[0]

    x2d = x.reshape(-1, hidden)
    M = x2d.shape[0]

    # M tile: as large as requested, clamped to (8-aligned) M so tiny inputs
    # don't get padded up to a huge tile.
    tm_eff = min(tm, _round_up(M, 8))
    Mp = _round_up(M, tm_eff)
    if Mp != M:
        x2d = jnp.pad(x2d, ((0, Mp - M), (0, 0)))

    tn = _pick_inter_tile(inter)

    # Pre-transpose weights (one-time XLA op) so the kernel runs plain
    # row-major matmuls on the MXU.
    w1_t = w1.T                     # (hidden, intermediate)
    w2_t = w2.T                     # (intermediate, hidden)
    b1_2d = b1.reshape(1, inter)
    b2_2d = b2.reshape(1, hidden)

    bytes_accessed = (
        x2d.size * x2d.dtype.itemsize
        + w1.size * w1.dtype.itemsize + b1.size * b1.dtype.itemsize
        + w2.size * w2.dtype.itemsize + b2.size * b2.dtype.itemsize
        + Mp * hidden * x.dtype.itemsize)
    cost = pl.CostEstimate(flops=4 * Mp * hidden * inter,
                           transcendentals=Mp * inter,
                           bytes_accessed=bytes_accessed)

    out = pl.pallas_call(
        _ffn_kernel,
        out_shape=jax.ShapeDtypeStruct((Mp, hidden), x.dtype),
        grid_spec=pltpu.PrefetchScalarGridSpec(
            num_scalar_prefetch=0,
            grid=(Mp // tm_eff, inter // tn),
            in_specs=[
                pl.BlockSpec((tm_eff, hidden), lambda i, j: (i, 0)),
                pl.BlockSpec((hidden, tn), lambda i, j: (0, j)),
                pl.BlockSpec((1, tn), lambda i, j: (0, j)),
                pl.BlockSpec((tn, hidden), lambda i, j: (j, 0)),
                pl.BlockSpec((1, hidden), lambda i, j: (0, 0)),
            ],
            out_specs=pl.BlockSpec((tm_eff, hidden), lambda i, j: (i, 0)),
            scratch_shapes=[pltpu.VMEM((tm_eff, hidden), jnp.float32)],
        ),
        compiler_params=pltpu.CompilerParams(
            dimension_semantics=("parallel", "arbitrary"),
            vmem_limit_bytes=64 * 1024 * 1024,
        ),
        cost_estimate=cost,
    )(x2d, w1_t, b1_2d, w2_t, b2_2d)

    if Mp != M:
        out = out[:M]
    return out.reshape(orig_shape)


def init_params(key, hidden_size, intermediate_size, dtype=jnp.float32):
    """Deterministic init mimicking nn.Linear (uniform ±1/sqrt(fan_in))."""
    k1, k2, k3, k4 = jax.random.split(key, 4)
    lim1 = 1.0 / jnp.sqrt(hidden_size)
    lim2 = 1.0 / jnp.sqrt(intermediate_size)
    w1 = jax.random.uniform(k1, (intermediate_size, hidden_size), dtype,
                            minval=-lim1, maxval=lim1)
    b1 = jax.random.uniform(k2, (intermediate_size,), dtype,
                            minval=-lim1, maxval=lim1)
    w2 = jax.random.uniform(k3, (hidden_size, intermediate_size), dtype,
                            minval=-lim2, maxval=lim2)
    b2 = jax.random.uniform(k4, (hidden_size,), dtype,
                            minval=-lim2, maxval=lim2)
    return w1, b1, w2, b2


def _reference(x, w1, b1, w2, b2):
    # plain-JAX reference (exact GELU, dropout = identity at eval)
    h = x @ w1.T + b1
    h = 0.5 * h * (1.0 + lax.erf(h / jnp.sqrt(2.0)))
    return h @ w2.T + b2


if __name__ == "__main__":
    key = jax.random.PRNGKey(0)

    # --- small smoke test (single grid step) -------------------------------
    hidden_size, intermediate_size = 32, 64
    batch, seq = 2, 8
    kx, kp, key = jax.random.split(key, 3)
    x = jax.random.normal(kx, (batch, seq, hidden_size), jnp.float32)
    w1, b1, w2, b2 = init_params(kp, hidden_size, intermediate_size)

    out = jax.block_until_ready(feed_forward(x, w1, b1, w2, b2))
    ref = _reference(x, w1, b1, w2, b2)
    assert out.shape == (batch, seq, hidden_size)
    assert jnp.allclose(out, ref, atol=1e-5, rtol=1e-5)

    # --- multi-step reduction test (exercises accumulator across j) --------
    hidden_size, intermediate_size = 128, 1024
    batch, seq = 2, 64
    kx, kp = jax.random.split(key)
    x = jax.random.normal(kx, (batch, seq, hidden_size), jnp.float32)
    w1, b1, w2, b2 = init_params(kp, hidden_size, intermediate_size)

    out = jax.block_until_ready(feed_forward(x, w1, b1, w2, b2))
    ref = _reference(x, w1, b1, w2, b2)
    assert out.shape == (batch, seq, hidden_size)
    assert jnp.allclose(out, ref, atol=1e-4, rtol=1e-4)

    print("KERNEL_OK")
</pallas_src>

<mosaic_0001>
module attributes {stable_mosaic.version = 11 : i64} {
  func.func @_ffn_kernel(%arg0: i32, %arg1: i32, %arg2: memref<16x32xf32, #tpu.memory_space<vmem>>, %arg3: memref<32x64xf32, #tpu.memory_space<vmem>>, %arg4: memref<1x64xf32, #tpu.memory_space<vmem>>, %arg5: memref<64x32xf32, #tpu.memory_space<vmem>>, %arg6: memref<1x32xf32, #tpu.memory_space<vmem>>, %arg7: memref<16x32xf32, #tpu.memory_space<vmem>>, %arg8: memref<16x32xf32, #tpu.memory_space<vmem>>) attributes {dimension_semantics = [#tpu.dimension_semantics<parallel>, #tpu.dimension_semantics<arbitrary>], iteration_bounds = array<i64: 1, 1>, scalar_prefetch = 0 : i64, scratch_operands = 1 : i64, tpu.core_type = #tpu.core_type<tc>, window_params = [{transform_indices = @transform_0, window_bounds = array<i64: 16, 32>}, {transform_indices = @transform_1, window_bounds = array<i64: 32, 64>}, {transform_indices = @transform_2, window_bounds = array<i64: 1, 64>}, {transform_indices = @transform_3, window_bounds = array<i64: 64, 32>}, {pipeline_mode = #tpu.pipeline_mode<synchronous>, transform_indices = @transform_4, window_bounds = array<i64: 1, 32>}, {transform_indices = @transform_5, window_bounds = array<i64: 16, 32>}]} {
    %c0_i32 = arith.constant 0 : i32
    %0 = arith.cmpi eq, %arg1, %c0_i32 : i32
    %1 = arith.extui %0 : i1 to i32
    %c0_i32_0 = arith.constant 0 : i32
    %2 = arith.cmpi ne, %1, %c0_i32_0 : i32
    scf.if %2 {
      %cst_18 = arith.constant 0.000000e+00 : f32
      %25 = vector.broadcast %cst_18 : f32 to vector<16x32xf32>
      %c0_19 = arith.constant 0 : index
      %c0_20 = arith.constant 0 : index
      %26 = vector.load %arg8[%c0_19, %c0_20] : memref<16x32xf32, #tpu.memory_space<vmem>>, vector<16x32xf32>
      tpu.vector_store %arg8[%c0_19, %c0_20], %25 {strides = array<i32>} : memref<16x32xf32, #tpu.memory_space<vmem>>, vector<16x32xf32>,
    } else {
    }
    %c0 = arith.constant 0 : index
    %c0_1 = arith.constant 0 : index
    %3 = vector.load %arg2[%c0, %c0_1] : memref<16x32xf32, #tpu.memory_space<vmem>>, vector<16x32xf32>
    %c0_2 = arith.constant 0 : index
    %c0_3 = arith.constant 0 : index
    %4 = vector.load %arg3[%c0_2, %c0_3] : memref<32x64xf32, #tpu.memory_space<vmem>>, vector<32x64xf32>
    %cst = arith.constant dense<0.000000e+00> : vector<16x64xf32>
    %5 = tpu.matmul %3, %4, %cst {dimension_numbers = #tpu.dot_dimension_numbers<[1], [0], [0], [1], [0, 0, 1, 1], [], []>} : vector<16x32xf32>, vector<32x64xf32>, vector<16x64xf32> -> vector<16x64xf32>
    %c0_4 = arith.constant 0 : index
    %c0_5 = arith.constant 0 : index
    %6 = vector.load %arg4[%c0_4, %c0_5] : memref<1x64xf32, #tpu.memory_space<vmem>>, vector<1x64xf32>
    %7 = vector.broadcast %6 : vector<1x64xf32> to vector<16x64xf32>
    %8 = arith.addf %5, %7 : vector<16x64xf32>
    %cst_6 = arith.constant 5.000000e-01 : f32
    %9 = vector.broadcast %cst_6 : f32 to vector<16x64xf32>
    %10 = arith.mulf %9, %8 : vector<16x64xf32>
    %cst_7 = arith.constant 0.707106769 : f32
    %11 = vector.broadcast %cst_7 : f32 to vector<16x64xf32>
    %12 = arith.mulf %8, %11 : vector<16x64xf32>
    %13 = math.erf %12 : vector<16x64xf32>
    %cst_8 = arith.constant 1.000000e+00 : f32
    %14 = vector.broadcast %cst_8 : f32 to vector<16x64xf32>
    %15 = arith.addf %14, %13 : vector<16x64xf32>
    %16 = arith.mulf %10, %15 : vector<16x64xf32>
    %c0_9 = arith.constant 0 : index
    %c0_10 = arith.constant 0 : index
    %17 = vector.load %arg8[%c0_9, %c0_10] : memref<16x32xf32, #tpu.memory_space<vmem>>, vector<16x32xf32>
    %c0_11 = arith.constant 0 : index
    %c0_12 = arith.constant 0 : index
    %18 = vector.load %arg5[%c0_11, %c0_12] : memref<64x32xf32, #tpu.memory_space<vmem>>, vector<64x32xf32>
    %cst_13 = arith.constant dense<0.000000e+00> : vector<16x32xf32>
    %19 = tpu.matmul %16, %18, %cst_13 {dimension_numbers = #tpu.dot_dimension_numbers<[1], [0], [0], [1], [0, 0, 1, 1], [], []>} : vector<16x64xf32>, vector<64x32xf32>, vector<16x32xf32> -> vector<16x32xf32>
    %20 = arith.addf %17, %19 : vector<16x32xf32>
    %c0_14 = arith.constant 0 : index
    %c0_15 = arith.constant 0 : index
    %21 = vector.load %arg8[%c0_14, %c0_15] : memref<16x32xf32, #tpu.memory_space<vmem>>, vector<16x32xf32>
    tpu.vector_store %arg8[%c0_14, %c0_15], %20 {strides = array<i32>} : memref<16x32xf32, #tpu.memory_space<vmem>>, vector<16x32xf32>,
    %c0_i32_16 = arith.constant 0 : i32
    %22 = arith.cmpi eq, %arg1, %c0_i32_16 : i32
    %23 = arith.extui %22 : i1 to i32
    %c0_i32_17 = arith.constant 0 : i32
    %24 = arith.cmpi ne, %23, %c0_i32_17 : i32
    scf.if %24 {
      %c0_18 = arith.constant 0 : index
      %c0_19 = arith.constant 0 : index
      %25 = vector.load %arg8[%c0_18, %c0_19] : memref<16x32xf32, #tpu.memory_space<vmem>>, vector<16x32xf32>
      %c0_20 = arith.constant 0 : index
      %c0_21 = arith.constant 0 : index
      %26 = vector.load %arg6[%c0_20, %c0_21] : memref<1x32xf32, #tpu.memory_space<vmem>>, vector<1x32xf32>
      %27 = vector.broadcast %26 : vector<1x32xf32> to vector<16x32xf32>
      %28 = arith.addf %25, %27 : vector<16x32xf32>
      %c0_22 = arith.constant 0 : index
      %c0_23 = arith.constant 0 : index
      %29 = vector.load %arg7[%c0_22, %c0_23] : memref<16x32xf32, #tpu.memory_space<vmem>>, vector<16x32xf32>
      tpu.vector_store %arg7[%c0_22, %c0_23], %28 {strides = array<i32>} : memref<16x32xf32, #tpu.memory_space<vmem>>, vector<16x32xf32>,
    } else {
    }
    return
  }
  func.func @transform_0(%arg0: i32, %arg1: i32) -> (i32, i32) {
    %c0_i32 = arith.constant 0 : i32
    %c0_i32_0 = arith.constant 0 : i32
    return %arg0, %c0_i32 : i32, i32
  }
  func.func @transform_1(%arg0: i32, %arg1: i32) -> (i32, i32) {
    %c0_i32 = arith.constant 0 : i32
    %c0_i32_0 = arith.constant 0 : i32
    return %c0_i32, %arg1 : i32, i32
  }
  func.func @transform_2(%arg0: i32, %arg1: i32) -> (i32, i32) {
    %c0_i32 = arith.constant 0 : i32
    %c0_i32_0 = arith.constant 0 : i32
    return %c0_i32, %arg1 : i32, i32
  }
  func.func @transform_3(%arg0: i32, %arg1: i32) -> (i32, i32) {
    %c0_i32 = arith.constant 0 : i32
    %c0_i32_0 = arith.constant 0 : i32
    return %arg1, %c0_i32 : i32, i32
  }
  func.func @transform_4(%arg0: i32, %arg1: i32) -> (i32, i32) {
    %c0_i32 = arith.constant 0 : i32
    %c0_i32_0 = arith.constant 0 : i32
    %c0_i32_1 = arith.constant 0 : i32
    return %c0_i32, %c0_i32_0 : i32, i32
  }
  func.func @transform_5(%arg0: i32, %arg1: i32) -> (i32, i32) {
    %c0_i32 = arith.constant 0 : i32
    %c0_i32_0 = arith.constant 0 : i32
    return %arg0, %c0_i32 : i32, i32
  }
}

</mosaic_0001>

<llo_original>
// kernel: feed_forward.1
$region0: #{feed_forward.1}
  #allocation0 [shape = 'u32[]', space=smem, size = 0x4, offset = 0x4, fixed_abs, tag = 'smem constant byte address 0x4 - core index']
  #allocation1 [shape = 'u32[144,128]{1,0:T(1,128)}', space=vmem, size = 0x12000, scoped, tag = 'internal scratch']
  #allocation2 [shape = 'f32[16,32]{1,0:T(8,128)}', space=vmem, size = 0x2000, scoped, tag = 'scratch operand']
  %s0 = inlined_call_operand.hbm [shape: f32[16,32], index: 0, kind: input, shape index: {}]
  %s1 = inlined_call_operand.hbm [shape: f32[32,64], index: 1, kind: input, shape index: {}]
  %s2 = inlined_call_operand.hbm [shape: f32[1,64], index: 2, kind: input, shape index: {}]
  %s3 = inlined_call_operand.hbm [shape: f32[64,32], index: 3, kind: input, shape index: {}]
  %s4 = inlined_call_operand.hbm [shape: f32[1,32], index: 4, kind: input, shape index: {}]
  %s5 = inlined_call_operand.hbm [shape: f32[16,32], index: 5, kind: output, shape index: {}]
  %s6 = sld [smem:[#allocation0]]
  $region58: #{feed_forward.1} parent=0
    _
  %s8 = ssub.s32 1, %s6
  %s9 = scalar_select 0, %s8, %s6
  $region1: #{feed_forward.1} parent=0
    #allocation3 [shape = 'u8[8192]{0}', space=vmem, size = 0x2000, scoped, tag = 'input window, operand 0, single buffered']
    #allocation4 [shape = 's32[1]{0}', space=sflag, size = 0x4, scoped, tag = 'scoped memory for feed_forward.1']
    #allocation5 [shape = 's32[1]{0}', space=sflag, size = 0x4, scoped, tag = 'scoped memory for feed_forward.1']
    #allocation6 [shape = 'u8[16384]{0}', space=vmem, size = 0x4000, scoped, tag = 'input window, operand 1, single buffered']
    #allocation7 [shape = 's32[1]{0}', space=sflag, size = 0x4, scoped, tag = 'scoped memory for feed_forward.1']
    #allocation8 [shape = 'u8[512]{0}', space=vmem, size = 0x400, scoped, tag = 'input window, operand 2, single buffered']
    #allocation9 [shape = 'u8[32768]{0}', space=vmem, size = 0x8000, scoped, tag = 'input window, operand 3, single buffered']
    #allocation10 [shape = 's32[1]{0}', space=sflag, size = 0x4, scoped, tag = 'scoped memory for feed_forward.1']
    #allocation11 [shape = 'u8[512]{0}', space=vmem, size = 0x400, scoped, tag = 'input window, operand 4, single buffered']
    #allocation12 [shape = 'u8[8192]{0}', space=vmem, size = 0x2000, scoped, tag = 'output window, operand 0, single buffered']
    %10 = vsyncpa [#allocation4], 0
    %11 = vsyncpa [#allocation7], 0
    %12 = vsyncpa [#allocation10], 0
    %13 = vsyncpa [#allocation5], 0
    // Predicated region
    $region2: #{feed_forward.1} parent=1 // pred_check
      _
    $region3: #{feed_forward.1} parent=1 // pred_check_branch
      %15 = sbr.rel (0) target = $region5
    $region4: #{feed_forward.1} parent=1 // pred_region
      %s17 = ssub.s32 256, 256
      %18 = vsyncadd [#allocation4], %s17
      %s19 = sshll.u32 [#allocation3], 4
      %s20 = int_to_ptr.vmem [resolvable:$true] %s19
      %25 = dma.hbm_to_vmem [thread:$0]  %s0, 256, %s20, [#allocation4], 128, 128, 8
    $region5: #{feed_forward.1} parent=1 // pred_fallthru
      _
    // Predicated region
    $region6: #{feed_forward.1} parent=1 // pred_check
      _
    $region7: #{feed_forward.1} parent=1 // pred_check_branch
      %27 = sbr.rel (0) target = $region9
    $region8: #{feed_forward.1} parent=1 // pred_region
      %s29 = ssub.s32 512, 512
      %30 = vsyncadd [#allocation7], %s29
      %s31 = sshll.u32 [#allocation6], 4
      %s32 = int_to_ptr.vmem [resolvable:$true] %s31
      %37 = dma.hbm_to_vmem [thread:$0]  %s1, 512, %s32, [#allocation7], 128, 128, 8
    $region9: #{feed_forward.1} parent=1 // pred_fallthru
      _
    // Predicated region
    $region10: #{feed_forward.1} parent=1 // pred_check
      _
    $region11: #{feed_forward.1} parent=1 // pred_check_branch
      %39 = sbr.rel (0) target = $region13
    $region12: #{feed_forward.1} parent=1 // pred_region
      %s41 = ssub.s32 16, 16
      %42 = vsyncadd [#allocation7], %s41
      %s44 = sshll.u32 [#allocation8], 4
      %s45 = int_to_ptr.vmem [resolvable:$true] %s44
      %47 = dma.hbm_to_vmem [thread:$0]  %s2, 16, %s45, [#allocation7]
    $region13: #{feed_forward.1} parent=1 // pred_fallthru
      _
    // Predicated region
    $region14: #{feed_forward.1} parent=1 // pred_check
      _
    $region15: #{feed_forward.1} parent=1 // pred_check_branch
      %49 = sbr.rel (0) target = $region17
    $region16: #{feed_forward.1} parent=1 // pred_region
      %s51 = ssub.s32 1024, 1024
      %52 = vsyncadd [#allocation10], %s51
      %s53 = sshll.u32 [#allocation9], 4
      %s54 = int_to_ptr.vmem [resolvable:$true] %s53
      %59 = dma.hbm_to_vmem [thread:$0]  %s3, 1024, %s54, [#allocation10], 128, 128, 8
    $region17: #{feed_forward.1} parent=1 // pred_fallthru
      _
    // Predicated region
    $region18: #{feed_forward.1} parent=1 // pred_check
      _
    $region19: #{feed_forward.1} parent=1 // pred_check_branch
      %61 = sbr.rel (0) target = $region21
    $region20: #{feed_forward.1} parent=1 // pred_region
      %s63 = ssub.s32 16, 16
      %64 = vsyncadd [#allocation10], %s63
      %s66 = sshll.u32 [#allocation11], 4
      %s67 = int_to_ptr.vmem [resolvable:$true] %s66
      %69 = dma.hbm_to_vmem [thread:$0]  %s4, 16, %s67, [#allocation10]
    $region21: #{feed_forward.1} parent=1 // pred_fallthru
      _
    // Predicated region
    $region22: #{feed_forward.1} parent=1 // pred_check
      _
    $region23: #{feed_forward.1} parent=1 // pred_check_branch
      %71 = sbr.rel (0) target = $region25
    $region24: #{feed_forward.1} parent=1 // pred_region
      %72 = dma.done [#allocation4], 256
    $region25: #{feed_forward.1} parent=1 // pred_fallthru
      _
    // Predicated region
    $region26: #{feed_forward.1} parent=1 // pred_check
      _
    $region27: #{feed_forward.1} parent=1 // pred_check_branch
      %74 = sbr.rel (0) target = $region29
    $region28: #{feed_forward.1} parent=1 // pred_region
      %75 = dma.done [#allocation7], 512
    $region29: #{feed_forward.1} parent=1 // pred_fallthru
      _
    // Predicated region
    $region30: #{feed_forward.1} parent=1 // pred_check
      _
    $region31: #{feed_forward.1} parent=1 // pred_check_branch
      %77 = sbr.rel (0) target = $region33
    $region32: #{feed_forward.1} parent=1 // pred_region
      %78 = dma.done [#allocation7], 16
    $region33: #{feed_forward.1} parent=1 // pred_fallthru
      _
    // Predicated region
    $region34: #{feed_forward.1} parent=1 // pred_check
      _
    $region35: #{feed_forward.1} parent=1 // pred_check_branch
      %80 = sbr.rel (0) target = $region37
    $region36: #{feed_forward.1} parent=1 // pred_region
      %81 = dma.done [#allocation10], 1024
    $region37: #{feed_forward.1} parent=1 // pred_fallthru
      _
    // Predicated region
    $region38: #{feed_forward.1} parent=1 // pred_check
      _
    $region39: #{feed_forward.1} parent=1 // pred_check_branch
      %83 = sbr.rel (0) target = $region41
    $region40: #{feed_forward.1} parent=1 // pred_region
      %84 = dma.done [#allocation10], 16
    $region41: #{feed_forward.1} parent=1 // pred_fallthru
      _
    %p85 = scmp.eq.s32.totalorder 0, 0
    // Predicated region
    $region42: #{feed_forward.1} parent=1 // pred_check
      %p86 = pneg %p85
    $region43: #{feed_forward.1} parent=1 // pred_check_branch
      %88 = sbr.rel (%p86) target = $region45
    $region44: #{feed_forward.1} parent=1 // pred_region
      %vm89 = vcmask 261120
      %90 = vst.msk [vmem:[#allocation2] sm:$0xff] %vm89, 0.0
      %91 = vst.msk [vmem:[#allocation2 + $0x8] sm:$0xff] %vm89, 0.0
    $region45: #{feed_forward.1} parent=1 // pred_fallthru
      _
    %v92 = vld [vmem:[#allocation3] sm:$0xff]
    %v93 = vld [vmem:[#allocation3 + $0x8] sm:$0xff]
    %v94 = vld [vmem:[#allocation6] sm:$0xff]
    %v95 = vld [vmem:[#allocation6 + $0x8] sm:$0xff]
    %v96 = vld [vmem:[#allocation6 + $0x10] sm:$0xff]
    %v97 = vld [vmem:[#allocation6 + $0x18] sm:$0xff]
    %v98 = vld [vmem:[#allocation8] sm:$0x1]
    %v100 = vlaneseq
    %v101 = vshrl.u32 %v100, 7
    %v102 = vsub.s32 0, %v101
    %v103 = vrot.slane %v98, %v102
    %vm105 = vcmask 261120
    %v107 = vsel %vm105, %v92, 0
    %v110 = vsel %vm105, %v93, 0
    %112 = vmatprep.subr.mxu0 0.0
    %113 = vmatpush1.msra.mxu0 %v94
    %114 = vmatprep.subr.mxu0 0.0
    %115 = vmatpush1.msra.mxu0 %v95
    %116 = vmatprep.subr.mxu0 0.0
    %117 = vmatpush1.msra.mxu0 %v96
    %118 = vmatprep.subr.mxu0 0.0
    %119 = vmatpush1.msra.mxu0 %v97
    %120 = vmatprep.subr.mxu0 0.0
    %121 = vmatpush1.msra.mxu0 0.0
    %122 = vmatprep.subr.mxu0 0.0
    %123 = vmatpush1.msra.mxu0 0.0
    %124 = vmatprep.subr.mxu0 0.0
    %125 = vmatpush1.msra.mxu0 0.0
    %126 = vmatprep.subr.mxu0 0.0
    %127 = vmatpush1.msra.mxu0 0.0
    %128 = vmatprep.subr.mxu0 0.0
    %129 = vmatpush1.msra.mxu0 0.0
    %130 = vmatprep.subr.mxu0 0.0
    %131 = vmatpush1.msra.mxu0 0.0
    %132 = vmatprep.subr.mxu0 0.0
    %133 = vmatpush1.msra.mxu0 0.0
    %134 = vmatprep.subr.mxu0 0.0
    %135 = vmatpush1.msra.mxu0 0.0
    %136 = vmatprep.subr.mxu0 0.0
    %137 = vmatpush1.msra.mxu0 0.0
    %138 = vmatprep.subr.mxu0 0.0
    %139 = vmatpush1.msra.mxu0 0.0
    %140 = vmatprep.subr.mxu0 0.0
    %141 = vmatpush1.msra.mxu0 0.0
    %142 = vmatprep.subr.mxu0 0.0
    %143 = vmatpush1.msra.mxu0 0.0
    %144 = vmatprep.subr.mxu0 0.0
    %145 = vmatpush1.msra.mxu0 0.0
    %146 = vmatprep.subr.mxu0 0.0
    %147 = vmatpush1.msra.mxu0 0.0
    %148 = vmatprep.subr.mxu0 0.0
    %149 = vmatpush1.msra.mxu0 0.0
    %150 = vmatprep.subr.mxu0 0.0
    %151 = vmatpush1.msra.mxu0 0.0
    %152 = vmatprep.subr.mxu0 0.0
    %153 = vmatpush1.msra.mxu0 0.0
    %154 = vmatprep.subr.mxu0 0.0
    %155 = vmatpush1.msra.mxu0 0.0
    %156 = vmatprep.subr.mxu0 0.0
    %157 = vmatpush1.msra.mxu0 0.0
    %158 = vmatprep.subr.mxu0 0.0
    %159 = vmatpush1.msra.mxu0 0.0
    %160 = vmatprep.subr.mxu0 0.0
    %161 = vmatpush1.msra.mxu0 0.0
    %162 = vmatprep.subr.mxu0 0.0
    %163 = vmatpush1.msra.mxu0 0.0
    %164 = vmatprep.subr.mxu0 0.0
    %165 = vmatpush1.msra.mxu0 0.0
    %166 = vmatprep.subr.mxu0 0.0
    %167 = vmatpush1.msra.mxu0 0.0
    %168 = vmatprep.subr.mxu0 0.0
    %169 = vmatpush1.msra.mxu0 0.0
    %170 = vmatprep.subr.mxu0 0.0
    %171 = vmatpush1.msra.mxu0 0.0
    %172 = vmatprep.subr.mxu0 0.0
    %173 = vmatpush1.msra.mxu0 0.0
    %174 = vmatprep.subr.mxu0 0.0
    %175 = vmatpush1.msra.mxu0 0.0
    %176 = vmatprep.mubr.f32.mxu0 0.0
    %177 = vmatmul.mubr.f32.gmra.mrb[0].mxu0 %v107
    %v178 = vpop.f32.mrb[0].mxu0
    %v179 = vadd.f32 %v103, %v178
    %v180 = vpop.f32.mrb[0].mxu0
    %181 = vmatprep.mubr.f32.mxu0 0.0
    %182 = vmatmul.mubr.f32.gmra.mrb[0].mxu0 %v110
    %v183 = vpop.f32.mrb[0].mxu0
    %v184 = vadd.f32 %v103, %v183
    %v185 = vpop.f32.mrb[0].mxu0
    %186 = vdwg.mxu0
    %v187 = vmul.f32 %v179, 0.5
    %v188 = vmul.f32 %v184, 0.5
    %v189 = vmul.f32 %v179, 0.70710677
    %v190 = vmul.f32 %v184, 0.70710677
    %v191 = verf.f32.pop %v189
    %v192 = verf.f32.pop %v190
    %v193 = vadd.f32 %v191, 1.0
    %v194 = vadd.f32 %v192, 1.0
    %v195 = vmul.f32 %v187, %v193
    %v196 = vmul.f32 %v188, %v194
    %v197 = vld [vmem:[#allocation2] sm:$0xff]
    %v198 = vld [vmem:[#allocation2 + $0x8] sm:$0xff]
    %v199 = vld [vmem:[#allocation9] sm:$0xff]
    %v200 = vld [vmem:[#allocation9 + $0x8] sm:$0xff]
    %v201 = vld [vmem:[#allocation9 + $0x10] sm:$0xff]
    %v202 = vld [vmem:[#allocation9 + $0x18] sm:$0xff]
    %v203 = vld [vmem:[#allocation9 + $0x20] sm:$0xff]
    %v204 = vld [vmem:[#allocation9 + $0x28] sm:$0xff]
    %v205 = vld [vmem:[#allocation9 + $0x30] sm:$0xff]
    %v206 = vld [vmem:[#allocation9 + $0x38] sm:$0xff]
    %vm207 = vcmask 523264
    %v209 = vsel %vm207, %v195, 0
    %v212 = vsel %vm207, %v196, 0
    %214 = vmatprep.subr.mxu0 0.0
    %215 = vmatpush1.msra.mxu0 %v199
    %216 = vmatprep.subr.mxu0 0.0
    %217 = vmatpush1.msra.mxu0 %v200
    %218 = vmatprep.subr.mxu0 0.0
    %219 = vmatpush1.msra.mxu0 %v201
    %220 = vmatprep.subr.mxu0 0.0
    %221 = vmatpush1.msra.mxu0 %v202
    %222 = vmatprep.subr.mxu0 0.0
    %223 = vmatpush1.msra.mxu0 %v203
    %224 = vmatprep.subr.mxu0 0.0
    %225 = vmatpush1.msra.mxu0 %v204
    %226 = vmatprep.subr.mxu0 0.0
    %227 = vmatpush1.msra.mxu0 %v205
    %228 = vmatprep.subr.mxu0 0.0
    %229 = vmatpush1.msra.mxu0 %v206
    %230 = vmatprep.subr.mxu0 0.0
    %231 = vmatpush1.msra.mxu0 0.0
    %232 = vmatprep.subr.mxu0 0.0
    %233 = vmatpush1.msra.mxu0 0.0
    %234 = vmatprep.subr.mxu0 0.0
    %235 = vmatpush1.msra.mxu0 0.0
    %236 = vmatprep.subr.mxu0 0.0
    %237 = vmatpush1.msra.mxu0 0.0
    %238 = vmatprep.subr.mxu0 0.0
    %239 = vmatpush1.msra.mxu0 0.0
    %240 = vmatprep.subr.mxu0 0.0
    %241 = vmatpush1.msra.mxu0 0.0
    %242 = vmatprep.subr.mxu0 0.0
    %243 = vmatpush1.msra.mxu0 0.0
    %244 = vmatprep.subr.mxu0 0.0
    %245 = vmatpush1.msra.mxu0 0.0
    %246 = vmatprep.subr.mxu0 0.0
    %247 = vmatpush1.msra.mxu0 0.0
    %248 = vmatprep.subr.mxu0 0.0
    %249 = vmatpush1.msra.mxu0 0.0
    %250 = vmatprep.subr.mxu0 0.0
    %251 = vmatpush1.msra.mxu0 0.0
    %252 = vmatprep.subr.mxu0 0.0
    %253 = vmatpush1.msra.mxu0 0.0
    %254 = vmatprep.subr.mxu0 0.0
    %255 = vmatpush1.msra.mxu0 0.0
    %256 = vmatprep.subr.mxu0 0.0
    %257 = vmatpush1.msra.mxu0 0.0
    %258 = vmatprep.subr.mxu0 0.0
    %259 = vmatpush1.msra.mxu0 0.0
    %260 = vmatprep.subr.mxu0 0.0
    %261 = vmatpush1.msra.mxu0 0.0
    %262 = vmatprep.subr.mxu0 0.0
    %263 = vmatpush1.msra.mxu0 0.0
    %264 = vmatprep.subr.mxu0 0.0
    %265 = vmatpush1.msra.mxu0 0.0
    %266 = vmatprep.subr.mxu0 0.0
    %267 = vmatpush1.msra.mxu0 0.0
    %268 = vmatprep.subr.mxu0 0.0
    %269 = vmatpush1.msra.mxu0 0.0
    %270 = vmatprep.subr.mxu0 0.0
    %271 = vmatpush1.msra.mxu0 0.0
    %272 = vmatprep.subr.mxu0 0.0
    %273 = vmatpush1.msra.mxu0 0.0
    %274 = vmatprep.subr.mxu0 0.0
    %275 = vmatpush1.msra.mxu0 0.0
    %276 = vmatprep.subr.mxu0 0.0
    %277 = vmatpush1.msra.mxu0 0.0
    %278 = vmatprep.mubr.f32.mxu0 0.0
    %279 = vmatmul.mubr.f32.gmra.mrb[0].mxu0 %v209
    %v280 = vpop.f32.mrb[0].mxu0
    %v281 = vadd.f32 0.0, %v280
    %v282 = vpop.f32.mrb[0].mxu0
    %283 = vmatprep.mubr.f32.mxu0 0.0
    %284 = vmatmul.mubr.f32.gmra.mrb[0].mxu0 %v212
    %v285 = vpop.f32.mrb[0].mxu0
    %v286 = vadd.f32 0.0, %v285
    %v287 = vpop.f32.mrb[0].mxu0
    %288 = vdwg.mxu0
    %v289 = vadd.f32 %v197, %v281
    %v290 = vadd.f32 %v198, %v286
    %291 = vst.msk [vmem:[#allocation2] sm:$0xff] %vm105, %v289
    %292 = vst.msk [vmem:[#allocation2 + $0x8] sm:$0xff] %vm105, %v290
    // Predicated region
    $region46: #{feed_forward.1} parent=1 // pred_check
      %p293 = pneg %p85
    $region47: #{feed_forward.1} parent=1 // pred_check_branch
      %295 = sbr.rel (%p293) target = $region49
    $region48: #{feed_forward.1} parent=1 // pred_region
      %v296 = vld [vmem:[#allocation2] sm:$0xff]
      %v297 = vld [vmem:[#allocation2 + $0x8] sm:$0xff]
      %v298 = vld [vmem:[#allocation11] sm:$0x1]
      %v300 = vlaneseq
      %v301 = vshrl.u32 %v300, 7
      %v302 = vsub.s32 0, %v301
      %v303 = vrot.slane %v298, %v302
      %v305 = vadd.f32 %v296, %v303
      %v306 = vadd.f32 %v297, %v303
      %307 = vst.msk [vmem:[#allocation12] sm:$0xff] %vm105, %v305
      %308 = vst.msk [vmem:[#allocation12 + $0x8] sm:$0xff] %vm105, %v306
    $region49: #{feed_forward.1} parent=1 // pred_fallthru
      _
    // Predicated region
    $region50: #{feed_forward.1} parent=1 // pred_check
      _
    $region51: #{feed_forward.1} parent=1 // pred_check_branch
      %310 = sbr.rel (0) target = $region53
    $region52: #{feed_forward.1} parent=1 // pred_region
      %s312 = ssub.s32 256, 256
      %313 = vsyncadd [#allocation5], %s312
      %s314 = sshll.u32 [#allocation12], 4
      %s315 = int_to_ptr.vmem [resolvable:$true] %s314
      %320 = dma.vmem_to_hbm [thread:$0]  %s315, 256, %s5, [#allocation5], 128, 128, 8
    $region53: #{feed_forward.1} parent=1 // pred_fallthru
      _
    // Predicated region
    $region54: #{feed_forward.1} parent=1 // pred_check
      _
    $region55: #{feed_forward.1} parent=1 // pred_check_branch
      %322 = sbr.rel (0) target = $region57
    $region56: #{feed_forward.1} parent=1 // pred_region
      %323 = dma.done [#allocation5], 256
    $region57: #{feed_forward.1} parent=1 // pred_fallthru
      _
    %324 = vsyncpa [#allocation4], 1
    %325 = vsyncpa [#allocation7], 1
    %326 = vsyncpa [#allocation10], 1
    %327 = vsyncpa [#allocation5], 1

</llo_original>
